<compile_context>
chip_gen: v7x
topology: tpu7x:2x2x1
jax: 0.10.0
libtpu: 0.0.40
codegen_flags: <defaults>
</compile_context>

<pallas_src>
import functools

import jax
import jax.numpy as jnp
from jax.experimental import pallas as pl
from jax.experimental.pallas import tpu as pltpu

_LANES = 128                 # vreg lane width (last dim)
_SUBL = 8                    # sublane multiple
_DEFAULT_BLOCK_ROWS = 8192   # 8192 x 128 f32 = 4 MiB per input per pipeline buffer


def _log_stft_mag_kernel(block_rows, valid_rows, ragged, single_log,
                         p_ref, t_ref, acc_ref):
    i = pl.program_id(0)

    # init the resident (sublane, 128) accumulator (the kernel output) on step 0
    @pl.when(i == 0)
    def _():
        acc_ref[...] = jnp.zeros_like(acc_ref)

    # cast in-kernel only (bf16 inputs halve DMA bytes; compute stays f32)
    p = p_ref[...].astype(jnp.float32)
    t = t_ref[...].astype(jnp.float32)

    if ragged:
        # Mask out-of-bounds rows of the last block to 1.0 BEFORE the log:
        # log(1) - log(1) = 0 exactly, and garbage (<=0/NaN) never reaches the log.
        row_ids = jax.lax.broadcasted_iota(jnp.int32, p.shape, 0)
        in_bounds = row_ids < (valid_rows - i * block_rows)
        p = jnp.where(in_bounds, p, 1.0)
        t = jnp.where(in_bounds, t, 1.0)

    if single_log:
        # v7x EUP relief: one log + one approximate reciprocal instead of two logs.
        d = jnp.abs(jnp.log(p * pl.reciprocal(t, approx=True)))
    else:
        d = jnp.abs(jnp.log(p) - jnp.log(t))

    # collapse the block into (sublane, 128) lane-partials with pure VPU adds
    nsub = acc_ref.shape[0]
    acc_ref[...] += d.reshape(-1, nsub, d.shape[-1]).sum(axis=0)


def log_stft_magnitude(predicts_mag, targets_mag, *,
                       block_rows=_DEFAULT_BLOCK_ROWS, single_log=False):
    """Pallas TPU implementation of LogSTFTMagnitude.forward.

    Notes:
      * Assumes contiguous row-major inputs: the flattening reshape is then free.
        Strided/transposed inputs would force XLA to materialize a copy upstream.
      * bf16 inputs are accepted and recommended where tolerable (memory-bound kernel).
      * block_rows: sweep 4096-16384; keep <= 8192 (32 MiB scoped VMEM) on v7x.
    """
    assert predicts_mag.shape == targets_mag.shape
    n = predicts_mag.size

    p_flat = predicts_mag.reshape(-1)
    t_flat = targets_mag.reshape(-1)

    rem = n % _LANES
    if rem:
        # TODO(synk): this tiny-tail case (numel % 128 != 0) still pays a full pad
        # copy; a zero-copy path would need a non-lane-dense (rows, last_dim) layout.
        pad = _LANES - rem
        p_flat = jnp.pad(p_flat, (0, pad), constant_values=1.0)
        t_flat = jnp.pad(t_flat, (0, pad), constant_values=1.0)

    rows = p_flat.size // _LANES
    p2d = p_flat.reshape(rows, _LANES)   # free for contiguous inputs
    t2d = t_flat.reshape(rows, _LANES)

    if rows <= _SUBL:
        blk = rows            # full-dim block for tiny inputs (always a legal block)
        acc_rows = rows
    else:
        blk = max(_SUBL, min((int(block_rows) // _SUBL) * _SUBL,
                             (rows // _SUBL) * _SUBL))
        acc_rows = _SUBL

    nb = pl.cdiv(rows, blk)
    ragged = (rows % blk) != 0

    kernel = functools.partial(_log_stft_mag_kernel, blk, rows, ragged, single_log)

    itemsize = max(p2d.dtype.itemsize, t2d.dtype.itemsize)
    # 2 inputs x 2 pipeline buffers x block bytes, plus headroom; >= 32 MiB default.
    vmem_limit = min(96 << 20, max(32 << 20, 4 * blk * _LANES * itemsize + (8 << 20)))

    partials = pl.pallas_call(
        kernel,
        out_shape=jax.ShapeDtypeStruct((acc_rows, _LANES), jnp.float32),
        grid_spec=pltpu.PrefetchScalarGridSpec(
            num_scalar_prefetch=0,
            grid=(nb,),
            in_specs=[
                pl.BlockSpec((blk, _LANES), lambda i: (i, 0)),
                pl.BlockSpec((blk, _LANES), lambda i: (i, 0)),
            ],
            out_specs=pl.BlockSpec((acc_rows, _LANES), lambda i: (0, 0)),
        ),
        compiler_params=pltpu.CompilerParams(
            dimension_semantics=("arbitrary",),   # reduction axis; output is resident
            vmem_limit_bytes=vmem_limit,
        ),
    )(p2d, t2d)

    # final cross-lane/sublane reduce + mean: at most 1024 floats, negligible
    return jnp.sum(partials) / n


if __name__ == "__main__":
    key = jax.random.PRNGKey(0)
    k1, k2, k3, k4, k5, k6 = jax.random.split(key, 6)

    def ref_loss(p, t):
        return jnp.mean(jnp.abs(jnp.log(p) - jnp.log(t)))

    # main check: small magnitude spectrogram (batch=2, channels=4, frames=16, freq=16)
    shape = (2, 4, 16, 16)
    p = jnp.abs(jax.random.normal(k1, shape, dtype=jnp.float32)) + 1e-3
    t = jnp.abs(jax.random.normal(k2, shape, dtype=jnp.float32)) + 1e-3
    loss = jax.block_until_ready(log_stft_magnitude(p, t))
    assert jnp.allclose(loss, ref_loss(p, t), rtol=1e-5, atol=1e-6), (loss, ref_loss(p, t))

    # ragged-grid check: rows (=15) not a multiple of the 8-row block -> exercises the
    # in-kernel tail mask (no wrapper pad / extra HBM copy).
    shape = (3, 5, 128)
    p = jnp.abs(jax.random.normal(k3, shape, dtype=jnp.float32)) + 1e-3
    t = jnp.abs(jax.random.normal(k4, shape, dtype=jnp.float32)) + 1e-3
    loss = jax.block_until_ready(log_stft_magnitude(p, t))
    assert jnp.allclose(loss, ref_loss(p, t), rtol=1e-5, atol=1e-6), (loss, ref_loss(p, t))

    # numel % 128 != 0 fallback path (tiny 1.0-pad)
    shape = (2, 3, 7, 11)
    p = jnp.abs(jax.random.normal(k5, shape, dtype=jnp.float32)) + 1e-3
    t = jnp.abs(jax.random.normal(k6, shape, dtype=jnp.float32)) + 1e-3
    loss = jax.block_until_ready(log_stft_magnitude(p, t))
    assert jnp.allclose(loss, ref_loss(p, t), rtol=1e-5, atol=1e-6), (loss, ref_loss(p, t))

    print("KERNEL_OK")
</pallas_src>

<mosaic_0001>
module attributes {stable_mosaic.version = 11 : i64} {
  func.func @_log_stft_mag_kernel(%arg0: i32, %arg1: memref<16x128xf32, #tpu.memory_space<vmem>>, %arg2: memref<16x128xf32, #tpu.memory_space<vmem>>, %arg3: memref<8x128xf32, #tpu.memory_space<vmem>>) attributes {dimension_semantics = [#tpu.dimension_semantics<arbitrary>], iteration_bounds = array<i64: 1>, scalar_prefetch = 0 : i64, scratch_operands = 0 : i64, tpu.core_type = #tpu.core_type<tc>, window_params = [{transform_indices = @transform_0, window_bounds = array<i64: 16, 128>}, {transform_indices = @transform_1, window_bounds = array<i64: 16, 128>}, {pipeline_mode = #tpu.pipeline_mode<synchronous>, transform_indices = @transform_2, window_bounds = array<i64: 8, 128>}]} {
    %c0_i32 = arith.constant 0 : i32
    %0 = arith.cmpi eq, %arg0, %c0_i32 : i32
    %1 = arith.extui %0 : i1 to i32
    %c0_i32_0 = arith.constant 0 : i32
    %2 = arith.cmpi ne, %1, %c0_i32_0 : i32
    scf.if %2 {
      %cst_8 = arith.constant 0.000000e+00 : f32
      %14 = vector.broadcast %cst_8 : f32 to vector<8x128xf32>
      %c0_9 = arith.constant 0 : index
      %c0_10 = arith.constant 0 : index
      %15 = vector.load %arg3[%c0_9, %c0_10] : memref<8x128xf32, #tpu.memory_space<vmem>>, vector<8x128xf32>
      tpu.vector_store %arg3[%c0_9, %c0_10], %14 {strides = array<i32>} : memref<8x128xf32, #tpu.memory_space<vmem>>, vector<8x128xf32>,
    } else {
    }
    %c0 = arith.constant 0 : index
    %c0_1 = arith.constant 0 : index
    %3 = vector.load %arg1[%c0, %c0_1] : memref<16x128xf32, #tpu.memory_space<vmem>>, vector<16x128xf32>
    %c0_2 = arith.constant 0 : index
    %c0_3 = arith.constant 0 : index
    %4 = vector.load %arg2[%c0_2, %c0_3] : memref<16x128xf32, #tpu.memory_space<vmem>>, vector<16x128xf32>
    %5 = math.log %3 : vector<16x128xf32>
    %6 = math.log %4 : vector<16x128xf32>
    %7 = arith.subf %5, %6 : vector<16x128xf32>
    %8 = math.absf %7 : vector<16x128xf32>
    %c0_4 = arith.constant 0 : index
    %c0_5 = arith.constant 0 : index
    %9 = vector.load %arg3[%c0_4, %c0_5] : memref<8x128xf32, #tpu.memory_space<vmem>>, vector<8x128xf32>
    %10 = vector.shape_cast %8 : vector<16x128xf32> to vector<2x8x128xf32>
    %cst = arith.constant dense<0.000000e+00> : vector<8x128xf32>
    %11 = vector.multi_reduction <add>, %10, %cst [0] : vector<2x8x128xf32> to vector<8x128xf32>
    %12 = arith.addf %9, %11 : vector<8x128xf32>
    %c0_6 = arith.constant 0 : index
    %c0_7 = arith.constant 0 : index
    %13 = vector.load %arg3[%c0_6, %c0_7] : memref<8x128xf32, #tpu.memory_space<vmem>>, vector<8x128xf32>
    tpu.vector_store %arg3[%c0_6, %c0_7], %12 {strides = array<i32>} : memref<8x128xf32, #tpu.memory_space<vmem>>, vector<8x128xf32>,
    return
  }
  func.func @transform_0(%arg0: i32) -> (i32, i32) {
    %c0_i32 = arith.constant 0 : i32
    %c0_i32_0 = arith.constant 0 : i32
    return %arg0, %c0_i32 : i32, i32
  }
  func.func @transform_1(%arg0: i32) -> (i32, i32) {
    %c0_i32 = arith.constant 0 : i32
    %c0_i32_0 = arith.constant 0 : i32
    return %arg0, %c0_i32 : i32, i32
  }
  func.func @transform_2(%arg0: i32) -> (i32, i32) {
    %c0_i32 = arith.constant 0 : i32
    %c0_i32_0 = arith.constant 0 : i32
    %c0_i32_1 = arith.constant 0 : i32
    return %c0_i32, %c0_i32_0 : i32, i32
  }
}

</mosaic_0001>

<llo_original>
// kernel: tpu_custom_call.1
$region0: #{tpu_custom_call.1}
  #allocation0 [shape = 'u32[]', space=smem, size = 0x4, offset = 0x4, fixed_abs, tag = 'smem constant byte address 0x4 - core index']
  #allocation1 [shape = 'u32[144,128]{1,0:T(1,128)}', space=vmem, size = 0x12000, scoped, tag = 'internal scratch']
  %s0 = inlined_call_operand.hbm [shape: f32[16,128], index: 0, kind: input, shape index: {}]
  %s1 = inlined_call_operand.hbm [shape: f32[16,128], index: 1, kind: input, shape index: {}]
  %s2 = inlined_call_operand.hbm [shape: f32[8,128], index: 2, kind: output, shape index: {}]
  %s3 = sld [smem:[#allocation0]]
  $region30: #{tpu_custom_call.1} parent=0
    _
  %s5 = ssub.s32 1, %s3
  %s6 = scalar_select 0, %s5, %s3
  $region1: #{tpu_custom_call.1} parent=0
    #allocation2 [shape = 'u8[8192]{0}', space=vmem, size = 0x2000, scoped, tag = 'input window, operand 0, single buffered']
    #allocation3 [shape = 's32[1]{0}', space=sflag, size = 0x4, scoped, tag = 'scoped memory for tpu_custom_call.1']
    #allocation4 [shape = 's32[1]{0}', space=sflag, size = 0x4, scoped, tag = 'scoped memory for tpu_custom_call.1']
    #allocation5 [shape = 'u8[8192]{0}', space=vmem, size = 0x2000, scoped, tag = 'input window, operand 1, single buffered']
    #allocation6 [shape = 's32[1]{0}', space=sflag, size = 0x4, scoped, tag = 'scoped memory for tpu_custom_call.1']
    #allocation7 [shape = 'u8[4096]{0}', space=vmem, size = 0x1000, scoped, tag = 'output window, operand 0, single buffered']
    %7 = vsyncpa [#allocation3], 0
    %8 = vsyncpa [#allocation6], 0
    %9 = vsyncpa [#allocation4], 0
    // Predicated region
    $region2: #{tpu_custom_call.1} parent=1 // pred_check
      _
    $region3: #{tpu_custom_call.1} parent=1 // pred_check_branch
      %11 = sbr.rel (0) target = $region5
    $region4: #{tpu_custom_call.1} parent=1 // pred_region
      %s13 = ssub.s32 256, 256
      %14 = vsyncadd [#allocation3], %s13
      %s15 = sshll.u32 [#allocation2], 4
      %s16 = int_to_ptr.vmem [resolvable:$true] %s15
      %21 = dma.hbm_to_vmem [thread:$0]  %s0, 256, %s16, [#allocation3], 128, 128, 8
    $region5: #{tpu_custom_call.1} parent=1 // pred_fallthru
      _
    // Predicated region
    $region6: #{tpu_custom_call.1} parent=1 // pred_check
      _
    $region7: #{tpu_custom_call.1} parent=1 // pred_check_branch
      %23 = sbr.rel (0) target = $region9
    $region8: #{tpu_custom_call.1} parent=1 // pred_region
      %s25 = ssub.s32 256, 256
      %26 = vsyncadd [#allocation6], %s25
      %s27 = sshll.u32 [#allocation5], 4
      %s28 = int_to_ptr.vmem [resolvable:$true] %s27
      %33 = dma.hbm_to_vmem [thread:$0]  %s1, 256, %s28, [#allocation6], 128, 128, 8
    $region9: #{tpu_custom_call.1} parent=1 // pred_fallthru
      _
    // Predicated region
    $region10: #{tpu_custom_call.1} parent=1 // pred_check
      _
    $region11: #{tpu_custom_call.1} parent=1 // pred_check_branch
      %35 = sbr.rel (0) target = $region13
    $region12: #{tpu_custom_call.1} parent=1 // pred_region
      %36 = dma.done [#allocation3], 256
    $region13: #{tpu_custom_call.1} parent=1 // pred_fallthru
      _
    // Predicated region
    $region14: #{tpu_custom_call.1} parent=1 // pred_check
      _
    $region15: #{tpu_custom_call.1} parent=1 // pred_check_branch
      %38 = sbr.rel (0) target = $region17
    $region16: #{tpu_custom_call.1} parent=1 // pred_region
      %39 = dma.done [#allocation6], 256
    $region17: #{tpu_custom_call.1} parent=1 // pred_fallthru
      _
    %p40 = scmp.eq.s32.totalorder 0, 0
    // Predicated region
    $region18: #{tpu_custom_call.1} parent=1 // pred_check
      %p41 = pneg %p40
    $region19: #{tpu_custom_call.1} parent=1 // pred_check_branch
      %43 = sbr.rel (%p41) target = $region21
    $region20: #{tpu_custom_call.1} parent=1 // pred_region
      %44 = vst [vmem:[#allocation7] sm:$0xff] 0.0
    $region21: #{tpu_custom_call.1} parent=1 // pred_fallthru
      _
    %v45 = vld [vmem:[#allocation2] sm:$0xff]
    %v46 = vld [vmem:[#allocation2 + $0x8] sm:$0xff]
    %v47 = vld [vmem:[#allocation5] sm:$0xff]
    %v48 = vld [vmem:[#allocation5 + $0x8] sm:$0xff]
    %v49 = vlog2.pop %v45
    %v50 = vmul.f32 %v49, 0.6931472
    %v51 = vlog2.pop %v46
    %v52 = vmul.f32 %v51, 0.6931472
    %v53 = vlog2.pop %v47
    %v54 = vmul.f32 %v53, 0.6931472
    %v55 = vlog2.pop %v48
    %v56 = vmul.f32 %v55, 0.6931472
    %v57 = vsub.f32 %v50, %v54
    %v58 = vsub.f32 %v52, %v56
    %v59 = vand.u32 2147483647, %v57
    %v60 = vand.u32 2147483647, %v58
    %v61 = vld [vmem:[#allocation7] sm:$0xff]
    %v62 = vadd.f32 %v59, %v60
    %v63 = vadd.f32 %v61, %v62
    %64 = vst [vmem:[#allocation7] sm:$0xff] %v63
    // Predicated region
    $region22: #{tpu_custom_call.1} parent=1 // pred_check
      _
    $region23: #{tpu_custom_call.1} parent=1 // pred_check_branch
      %66 = sbr.rel (0) target = $region25
    $region24: #{tpu_custom_call.1} parent=1 // pred_region
      %s68 = ssub.s32 128, 128
      %69 = vsyncadd [#allocation4], %s68
      %s71 = sshll.u32 [#allocation7], 4
      %s72 = int_to_ptr.vmem [resolvable:$true] %s71
      %74 = dma.vmem_to_hbm [thread:$0]  %s72, 128, %s2, [#allocation4]
    $region25: #{tpu_custom_call.1} parent=1 // pred_fallthru
      _
    // Predicated region
    $region26: #{tpu_custom_call.1} parent=1 // pred_check
      _
    $region27: #{tpu_custom_call.1} parent=1 // pred_check_branch
      %76 = sbr.rel (0) target = $region29
    $region28: #{tpu_custom_call.1} parent=1 // pred_region
      %77 = dma.done [#allocation4], 128
    $region29: #{tpu_custom_call.1} parent=1 // pred_fallthru
      _
    %78 = vsyncpa [#allocation3], 1
    %79 = vsyncpa [#allocation6], 1
    %80 = vsyncpa [#allocation4], 1

</llo_original>
